<compile_context>
chip_gen: v5e
topology: v5e:2x2
jax: 0.10.0
libtpu: 0.0.40
codegen_flags: <defaults>
</compile_context>

<pallas_src>
from functools import partial

import jax
import jax.numpy as jnp
from jax.experimental import pallas as pl
from jax.experimental.pallas import tpu as pltpu

POOL = 7  # nn.AvgPool2d(7, stride=1)
_MIB = 1024 * 1024


# --------------------------- VMEM sizing helpers --------------------------- #
def _round_up(v, m):
    return ((v + m - 1) // m) * m


def _sublane_mult(dtype):
    # second-minor padding multiple by element width (f32:8, bf16:16, int8:32)
    return {4: 8, 2: 16, 1: 32}.get(jnp.dtype(dtype).itemsize, 8)


def _padded_tail_bytes(shape2, dtype):
    """VMEM bytes of one (sublane, lane) tile after (8/16/32, 128) padding."""
    sub, lane = shape2
    item = jnp.dtype(dtype).itemsize
    return _round_up(sub, _sublane_mult(dtype)) * _round_up(lane, 128) * item


def _physical_vmem_bytes():
    # Query real per-TensorCore VMEM when available; fall back to the smallest
    # supported generation (v7x: 64 MiB) so the budget is always safe.
    cap = 64 * _MIB
    try:
        cap = int(pltpu.get_tpu_info().vmem_capacity_bytes)
    except Exception:
        pass
    return cap


def _vmem_budget_bytes():
    # Budget for OUR double-buffered blocks: at most half the physical VMEM
    # and never more than 48 MiB (leaves room for compiler scratch).  This
    # generation-gates v7x (64 MiB/TC) vs v5e/v6e (128 MiB).
    return min(_physical_vmem_bytes() // 2, 48 * _MIB)


def _vmem_limit_for(block_bytes):
    # Honest scoped-VMEM request: actual padded block footprint + headroom,
    # clamped to the physical capacity (covers the sublane-rounding edge case
    # where b_tile could exceed the nominal budget).
    want = block_bytes + 4 * _MIB
    return int(min(_physical_vmem_bytes(), max(want, 16 * _MIB)))


def _pick_b_tile(n, in_tail_shape, in_dtype, c_out, out_dtype):
    """Rows of the batch per grid step, sized against the padded footprint."""
    budget = _vmem_budget_bytes()
    in_row = _padded_tail_bytes(in_tail_shape, in_dtype)       # per batch row
    out_row = _round_up(c_out, 128) * jnp.dtype(out_dtype).itemsize
    per_row = 2 * in_row + 2 * out_row                          # dbl-buffered in + out
    b_tile = max(1, min(n, budget // max(per_row, 1)))

    # Output block has b_tile on the sublane axis -> round to its packing
    # multiple (16 for bf16 keeps stores unmasked and lane-dense).
    round_mult = _sublane_mult(out_dtype)

    # Keep >= 2 grid steps for large N so both v7x TensorCores get work on the
    # "parallel" axis; the extra ~0.35us step overhead is noise on v5e/v6e.
    if n >= 2 * round_mult:
        b_tile = min(b_tile, pl.cdiv(n, 2))

    if b_tile < n:
        b_tile = max(round_mult, (b_tile // round_mult) * round_mult)
    return b_tile


# ----------------------------- Pallas kernels ------------------------------ #
def _pool_proj_kernel(x_ref, w_ref, o_ref, *, hw_total):
    """Fused full-window average pool + 1x1 channel projection.

    x_ref: (b_tile, C_in, HW) VMEM tile (NCHW map with H*W on lanes)
    w_ref: (C_in, C_out)
    o_ref: (b_tile, C_out)
    """
    # f32 accumulation; divisor is the FULL window (HW is never tiled).
    s = jnp.sum(x_ref[...].astype(jnp.float32), axis=-1)            # (b, C_in)
    mean = s * (1.0 / hw_total)
    o_ref[...] = jnp.dot(mean, w_ref[...].astype(jnp.float32),
                         preferred_element_type=jnp.float32).astype(o_ref.dtype)


def _avgpool_flatten_kernel(x_ref, o_ref, *, hw_total):
    """Generic pool+flatten: x_ref (b_tile, HW, C) channels-last -> o_ref (b_tile, C)."""
    s = jnp.sum(x_ref[...].astype(jnp.float32), axis=1)             # (b, C)
    o_ref[...] = (s * (1.0 / hw_total)).astype(o_ref.dtype)


# ------------------------------ entry points ------------------------------- #
def pool_project_flatten(pre_head, w, *, out_dtype=None, b_tile=None):
    """Fused AvgPool(full HW window) + 1x1 projection + flatten.

    pre_head: [N, C_in, HW]   (final backbone map, H*W flattened onto lanes)
    w:        [C_in, C_out]
    Returns [N, C_out] == view(AvgPool2d(sqrt(HW),1)(proj(pre_head)), [N,-1]);
    exact because the average over HW commutes with the per-pixel linear map.
    """
    n, c_in, hw = pre_head.shape
    assert w.shape[0] == c_in
    c_out = w.shape[1]
    out_dtype = out_dtype or pre_head.dtype

    if b_tile is None:
        b_tile = _pick_b_tile(n, (c_in, hw), pre_head.dtype, c_out, out_dtype)

    block_bytes = (2 * b_tile * _padded_tail_bytes((c_in, hw), pre_head.dtype)
                   + 2 * _padded_tail_bytes((c_in, c_out), w.dtype)
                   + 2 * _padded_tail_bytes((b_tile, c_out), out_dtype))

    return pl.pallas_call(
        partial(_pool_proj_kernel, hw_total=hw),
        out_shape=jax.ShapeDtypeStruct((n, c_out), out_dtype),
        grid_spec=pl.GridSpec(
            grid=(pl.cdiv(n, b_tile),),
            in_specs=[pl.BlockSpec((b_tile, c_in, hw), lambda i: (i, 0, 0)),
                      pl.BlockSpec((c_in, c_out), lambda i: (0, 0))],
            out_specs=pl.BlockSpec((b_tile, c_out), lambda i: (i, 0)),
        ),
        compiler_params=pltpu.CompilerParams(
            dimension_semantics=("parallel",),
            vmem_limit_bytes=_vmem_limit_for(block_bytes)),
    )(pre_head, w)


def avgpool_flatten_cl(x_cl, *, b_tile=None):
    """AvgPool over the full HW window + flatten, channels-last layout.

    x_cl: [N, HW, C] (C on lanes).  Returns [N, C].  Matches
    AvgPool2d(sqrt(HW), stride=1) on an exact HWxHW map + view(N, -1).
    """
    n, hw, c = x_cl.shape
    if b_tile is None:
        b_tile = _pick_b_tile(n, (hw, c), x_cl.dtype, c, x_cl.dtype)

    block_bytes = (2 * b_tile * _padded_tail_bytes((hw, c), x_cl.dtype)
                   + 2 * _padded_tail_bytes((b_tile, c), x_cl.dtype))

    return pl.pallas_call(
        partial(_avgpool_flatten_kernel, hw_total=hw),
        out_shape=jax.ShapeDtypeStruct((n, c), x_cl.dtype),
        grid_spec=pl.GridSpec(
            grid=(pl.cdiv(n, b_tile),),
            in_specs=[pl.BlockSpec((b_tile, hw, c), lambda i: (i, 0, 0))],
            out_specs=pl.BlockSpec((b_tile, c), lambda i: (i, 0)),
        ),
        compiler_params=pltpu.CompilerParams(
            dimension_semantics=("parallel",),
            vmem_limit_bytes=_vmem_limit_for(block_bytes)),
    )(x_cl)


def avgpool7_flatten_nchw(features_nchw):
    """PyTorch-contract entry point: NCHW [N, C, 7, 7] -> [N, C].

    Off the hot path: the transpose below is a full HBM round-trip of the
    feature map — when you control the producer, emit channels-last (or use
    the fused pool_project_flatten) instead.
    """
    n, c, h, w = features_nchw.shape
    assert h == POOL and w == POOL, "AvgPool2d(7, stride=1) expects a 7x7 map"
    x_cl = jnp.transpose(features_nchw, (0, 2, 3, 1)).reshape(n, h * w, c)
    return avgpool_flatten_cl(x_cl)


# --------------------------- backbone stand-in ----------------------------- #
def _mean_pool2d(x, k):
    # exact-factor spatial mean pooling on NCHW
    n, c, h, w = x.shape
    return x.reshape(n, c, h // k, k, w // k, k).mean(axis=(3, 5))


def _proj_channels(x, w):
    # 1x1-conv-like channel projection on NCHW: [N,Cin,H,W] x [Cin,Cout]
    return jnp.einsum("nchw,cd->ndhw", x, w)


def make_stub_params(key, c_in=3):
    # TODO(synk): EfficientNet-b3 `extract_features` is an external pretrained
    # backbone with no clean Pallas equivalent here; deterministic 1x1
    # projections below only provide correctly-shaped multi-scale features.
    ks = jax.random.split(key, 5)

    def w(k, cin, cout):
        return (jax.random.normal(k, (cin, cout), jnp.float32)
                * (1.0 / jnp.sqrt(cin)))

    return {
        "w_low_features": w(ks[0], c_in, 32),    # stride-/2 map
        "w_low":          w(ks[1], c_in, 48),    # stride-/4 map
        "w_mid":          w(ks[2], c_in, 96),    # stride-/8 map
        "w_high":         w(ks[3], c_in, 136),   # stride-/8 map
        "w_feat":         w(ks[4], c_in, 256),   # final 7x7 feature head
    }


def stub_extract_features(x, params):
    """Deterministic stand-in for EfficientNet.extract_features.

    Returns (pre_head, low_features, low, mid, high).  pre_head is the final
    stride-/8 map flattened to [N, C_in, HW]; its 1x1 head projection
    (w_feat) is applied INSIDE the fused Pallas pool+project kernel, which is
    exact because the 7x7 average pool commutes with a per-pixel linear map —
    this avoids ever materializing the [N, 49, C_out] feature map in HBM.
    The multi-scale intermediates keep the NCHW contract of the original.
    """
    low_features = _proj_channels(_mean_pool2d(x, 2), params["w_low_features"])  # [N,32,28,28]
    low          = _proj_channels(_mean_pool2d(x, 4), params["w_low"])           # [N,48,14,14]
    mid          = _proj_channels(_mean_pool2d(x, 8), params["w_mid"])           # [N,96,7,7]
    high         = _proj_channels(_mean_pool2d(x, 8), params["w_high"])          # [N,136,7,7]

    pooled8 = _mean_pool2d(x, 8)                                                 # [N,3,7,7]
    n, c, h, w = pooled8.shape
    pre_head = pooled8.reshape(n, c, h * w)                                      # [N,3,49]
    return pre_head, low_features, low, mid, high


# ------------------------------- Encoder ----------------------------------- #
def encoder_forward(x, params):
    """Pallas/JAX equivalent of Encoder.forward (version='b3')."""
    pre_head, low_features, low, mid, high = stub_extract_features(x, params)
    # features = AvgPool2d(7,1)(head(pre_head)).view(N,-1) with the 1x1 head
    # fused into the pooling kernel (pool commutes with the projection).
    features = pool_project_flatten(pre_head, params["w_feat"])
    return features, low_features, low, mid, high


# ------------------------------ reference ---------------------------------- #
def _ref_avgpool7_flatten_nchw(features_nchw):
    n, c, h, w = features_nchw.shape
    return features_nchw.reshape(n, c, h * w).mean(axis=-1)


if __name__ == "__main__":
    key = jax.random.PRNGKey(0)
    k_x, k_p = jax.random.split(key)

    # small image input: N=2, 3 channels, 56x56 so the /8 feature map is 7x7
    x = jax.random.normal(k_x, (2, 3, 56, 56), jnp.float32)
    params = make_stub_params(k_p)

    features, low_features, low, mid, high = jax.block_until_ready(
        encoder_forward(x, params))

    # sanity: shapes of all returned tensors
    assert features.shape == (2, 256)
    assert low_features.shape == (2, 32, 28, 28)
    assert low.shape == (2, 48, 14, 14)
    assert mid.shape == (2, 96, 7, 7)
    assert high.shape == (2, 136, 7, 7)

    # Reference in the original PyTorch order/layout: project THEN
    # AvgPool2d(7, stride=1) THEN flatten, all in NCHW.
    pooled8 = _mean_pool2d(x, 8)                                      # [N,3,7,7]
    features_nchw = _proj_channels(pooled8, params["w_feat"])         # [N,256,7,7]
    ref = _ref_avgpool7_flatten_nchw(features_nchw)
    assert jnp.allclose(features, ref, atol=1e-5, rtol=1e-5)

    # Module-contract kernels (off the hot path): NCHW entry point.
    out_nchw_path = jax.block_until_ready(avgpool7_flatten_nchw(features_nchw))
    assert jnp.allclose(out_nchw_path, ref, atol=1e-5, rtol=1e-5)

    # bf16 feature map through the generic channels-last kernel — the f32
    # accumulation keeps the pooled result accurate (halved HBM traffic path).
    feats_cl_bf16 = jnp.transpose(features_nchw, (0, 2, 3, 1)) \
                       .reshape(2, POOL * POOL, 256).astype(jnp.bfloat16)
    out_bf16 = jax.block_until_ready(avgpool_flatten_cl(feats_cl_bf16))
    assert jnp.allclose(out_bf16.astype(jnp.float32), ref, atol=3e-2, rtol=3e-2)

    print("KERNEL_OK")
</pallas_src>

<mosaic_0001>
module attributes {stable_mosaic.version = 11 : i64} {
  func.func @_pool_proj_kernel(%arg0: i32, %arg1: memref<2x3x49xf32, #tpu.memory_space<vmem>>, %arg2: memref<3x256xf32, #tpu.memory_space<vmem>>, %arg3: memref<2x256xf32, #tpu.memory_space<vmem>>) attributes {dimension_semantics = [#tpu.dimension_semantics<parallel>], iteration_bounds = array<i64: 1>, scalar_prefetch = 0 : i64, scratch_operands = 0 : i64, tpu.core_type = #tpu.core_type<tc>, window_params = [{transform_indices = @transform_0, window_bounds = array<i64: 2, 3, 49>}, {pipeline_mode = #tpu.pipeline_mode<synchronous>, transform_indices = @transform_1, window_bounds = array<i64: 3, 256>}, {transform_indices = @transform_2, window_bounds = array<i64: 2, 256>}]} {
    %c0 = arith.constant 0 : index
    %c0_0 = arith.constant 0 : index
    %c0_1 = arith.constant 0 : index
    %0 = vector.load %arg1[%c0, %c0_0, %c0_1] : memref<2x3x49xf32, #tpu.memory_space<vmem>>, vector<2x3x49xf32>
    %cst = arith.constant dense<0.000000e+00> : vector<2x3xf32>
    %1 = vector.multi_reduction <add>, %0, %cst [2] : vector<2x3x49xf32> to vector<2x3xf32>
    %cst_2 = arith.constant 0.0204081628 : f32
    %2 = vector.broadcast %cst_2 : f32 to vector<2x3xf32>
    %3 = arith.mulf %1, %2 : vector<2x3xf32>
    %c0_3 = arith.constant 0 : index
    %c0_4 = arith.constant 0 : index
    %4 = vector.load %arg2[%c0_3, %c0_4] : memref<3x256xf32, #tpu.memory_space<vmem>>, vector<3x256xf32>
    %cst_5 = arith.constant dense<0.000000e+00> : vector<2x256xf32>
    %5 = tpu.matmul %3, %4, %cst_5 {dimension_numbers = #tpu.dot_dimension_numbers<[1], [0], [0], [1], [0, 0, 1, 1], [], []>} : vector<2x3xf32>, vector<3x256xf32>, vector<2x256xf32> -> vector<2x256xf32>
    %c0_6 = arith.constant 0 : index
    %c0_7 = arith.constant 0 : index
    %6 = vector.load %arg3[%c0_6, %c0_7] : memref<2x256xf32, #tpu.memory_space<vmem>>, vector<2x256xf32>
    tpu.vector_store %arg3[%c0_6, %c0_7], %5 {strides = array<i32>} : memref<2x256xf32, #tpu.memory_space<vmem>>, vector<2x256xf32>,
    return
  }
  func.func @transform_0(%arg0: i32) -> (i32, i32, i32) {
    %c0_i32 = arith.constant 0 : i32
    %c0_i32_0 = arith.constant 0 : i32
    %c0_i32_1 = arith.constant 0 : i32
    return %arg0, %c0_i32, %c0_i32_0 : i32, i32, i32
  }
  func.func @transform_1(%arg0: i32) -> (i32, i32) {
    %c0_i32 = arith.constant 0 : i32
    %c0_i32_0 = arith.constant 0 : i32
    %c0_i32_1 = arith.constant 0 : i32
    return %c0_i32, %c0_i32_0 : i32, i32
  }
  func.func @transform_2(%arg0: i32) -> (i32, i32) {
    %c0_i32 = arith.constant 0 : i32
    %c0_i32_0 = arith.constant 0 : i32
    return %arg0, %c0_i32 : i32, i32
  }
}

</mosaic_0001>

<llo_original>
// kernel: tpu_custom_call.1
$region0: #{tpu_custom_call.1}
  #allocation0 [shape = 'u32[]', space=smem, size = 0x4, offset = 0x4, fixed_abs, tag = 'smem constant byte address 0x4 - core index']
  #allocation1 [shape = 'u32[72,128]{1,0:T(1,128)}', space=vmem, size = 0x9000, scoped, tag = 'internal scratch']
  %s0 = inlined_call_operand.vmem [shape: f32[2,3,49], index: 0, kind: input, shape index: {}]
  %s1 = inlined_call_operand.vmem [shape: f32[3,256], index: 1, kind: input, shape index: {}]
  %s2 = inlined_call_operand.hbm [shape: f32[2,256], index: 2, kind: output, shape index: {}]
  %s3 = sld [smem:[#allocation0]]
  $region18: #{tpu_custom_call.1} parent=0
    _
  %s5 = ssub.s32 1, %s3
  %s6 = scalar_select 0, %s5, %s3
  $region1: #{tpu_custom_call.1} parent=0
    #allocation2 [shape = 'u8[2048]{0}', space=vmem, size = 0x800, scoped, tag = 'output window, operand 0, single buffered']
    #allocation3 [shape = 's32[1]{0}', space=sflag, size = 0x4, scoped, tag = 'scoped memory for tpu_custom_call.1']
    %7 = vsyncpa [#allocation3], 0
    // Predicated region
    $region2: #{tpu_custom_call.1} parent=1 // pred_check
      _
    $region3: #{tpu_custom_call.1} parent=1 // pred_check_branch
      %9 = sbr.rel (0) target = $region5
    $region4: #{tpu_custom_call.1} parent=1 // pred_region
      _
    $region5: #{tpu_custom_call.1} parent=1 // pred_fallthru
      _
    // Predicated region
    $region6: #{tpu_custom_call.1} parent=1 // pred_check
      _
    $region7: #{tpu_custom_call.1} parent=1 // pred_check_branch
      %11 = sbr.rel (0) target = $region9
    $region8: #{tpu_custom_call.1} parent=1 // pred_region
      _
    $region9: #{tpu_custom_call.1} parent=1 // pred_fallthru
      _
    %v12 = vld [vmem:[%s0] sm:$0x7]
    %v13 = vld [vmem:[%s0 + $0x4] sm:$0x7]
    %vm14 = vcmask 395264
    %v15 = vsel %vm14, %v12, 0.0
    %16 = vadd.xlane.f32.xlu0 %v15
    %v17 = vpop.xlane.xlu0 %16
    %v18 = vsel %vm14, %v13, 0.0
    %19 = vadd.xlane.f32.xlu0 %v18
    %v20 = vpop.xlane.xlu0 %19
    %v21 = vmul.f32 %v17, 0.020408163
    %v22 = vmul.f32 %v20, 0.020408163
    %v23 = vld [vmem:[%s1] sm:$0x77]
    %v26 = vlaneseq
    %v27 = vand.u32 %v26, 127
    %v28 = vperm.slane %v21, %v27
    %v29 = vperm.slane %v22, %v27
    %vm30 = vcmask 1041409
    %v31 = vsel %vm30, %v29, %v28
    %33 = vst [vmem:[#allocation1] ss:$2 sm:$0xff] %v23
    %v34 = vld.sshfl [vmem:[#allocation1] sm:$0xff pattern:$0x75316420]
    %v35 = vld.sshfl [vmem:[#allocation1 + $0x8] sm:$0xff pattern:$0x75316420]
    %vm36 = vcmask 23552
    %v37 = vsel %vm36, %v31, 0
    %vm39 = vcmask 1042432
    %v40 = vsel %vm39, %v34, 0
    %v42 = vsel %vm39, %v35, 0
    %44 = vmatpush.msra.mxu0 0.0
    %45 = vmatpush.msra.mxu0 0.0
    %46 = vmatpush.msra.mxu0 0.0
    %47 = vmatpush.msra.mxu0 0.0
    %48 = vmatpush.msra.mxu0 0.0
    %49 = vmatpush.msra.mxu0 0.0
    %50 = vmatpush.msra.mxu0 0.0
    %51 = vmatpush.msra.mxu0 0.0
    %52 = vmatpush.msra.mxu0 0.0
    %53 = vmatpush.msra.mxu0 0.0
    %54 = vmatpush.msra.mxu0 0.0
    %55 = vmatpush.msra.mxu0 0.0
    %56 = vmatpush.msra.mxu0 0.0
    %57 = vmatpush.msra.mxu0 0.0
    %58 = vmatpush.msra.mxu0 0.0
    %59 = vmatpush.msra.mxu0 %v40
    %60 = vmatmul.f32.gmra.mxu0 %v37
    %v61 = vpop.f32.mrf.mxu0
    %v62 = vadd.f32 0.0, %v61
    %63 = vdwg.mxu0
    %64 = vmatpush.msra.mxu0 0.0
    %65 = vmatpush.msra.mxu0 0.0
    %66 = vmatpush.msra.mxu0 0.0
    %67 = vmatpush.msra.mxu0 0.0
    %68 = vmatpush.msra.mxu0 0.0
    %69 = vmatpush.msra.mxu0 0.0
    %70 = vmatpush.msra.mxu0 0.0
    %71 = vmatpush.msra.mxu0 0.0
    %72 = vmatpush.msra.mxu0 0.0
    %73 = vmatpush.msra.mxu0 0.0
    %74 = vmatpush.msra.mxu0 0.0
    %75 = vmatpush.msra.mxu0 0.0
    %76 = vmatpush.msra.mxu0 0.0
    %77 = vmatpush.msra.mxu0 0.0
    %78 = vmatpush.msra.mxu0 0.0
    %79 = vmatpush.msra.mxu0 %v42
    %80 = vmatmul.f32.gmra.mxu0 %v37
    %v81 = vpop.f32.mrf.mxu0
    %v82 = vadd.f32 0.0, %v81
    %83 = vdwg.mxu0
    %v86 = vrot.slane %v82, 6
    %vm87 = vcmask 1041408
    %v88 = vsel %vm87, %v62, %v86
    %90 = vst [vmem:[#allocation2] sm:$0xf] %v88
    // Predicated region
    $region10: #{tpu_custom_call.1} parent=1 // pred_check
      _
    $region11: #{tpu_custom_call.1} parent=1 // pred_check_branch
      %92 = sbr.rel (0) target = $region13
    $region12: #{tpu_custom_call.1} parent=1 // pred_region
      %94 = vsyncadd [#allocation3], 0
      %s96 = sshll.u32 [#allocation2], 4
      %s97 = int_to_ptr.vmem [resolvable:$true] %s96
      %s98 = sshll.u32 %s2, 4
      %s99 = int_to_ptr.hbm [resolvable:$true] %s98
      %101 = dma.vmem_to_hbm [thread:$0]  %s97, 64, %s99, [#allocation3]
    $region13: #{tpu_custom_call.1} parent=1 // pred_fallthru
      _
    // Predicated region
    $region14: #{tpu_custom_call.1} parent=1 // pred_check
      _
    $region15: #{tpu_custom_call.1} parent=1 // pred_check_branch
      %103 = sbr.rel (0) target = $region17
    $region16: #{tpu_custom_call.1} parent=1 // pred_region
      %105 = dma.done [#allocation3], 64
    $region17: #{tpu_custom_call.1} parent=1 // pred_fallthru
      _
    %106 = vsyncpa [#allocation3], 1

</llo_original>
